<compile_context>
chip_gen: v7x
topology: tpu7x:2x2x1
jax: 0.10.0
libtpu: 0.0.40
codegen_flags: <defaults>
</compile_context>

<pallas_src>
import functools

import jax
import jax.numpy as jnp
from jax.experimental import pallas as pl
from jax.experimental.pallas import tpu as pltpu


# ---------------------------------------------------------------------------
# Kernels
# ---------------------------------------------------------------------------
def _patches_whole_tile_kernel(x_ref, o_ref, *, ti, p, nW):
    """Lane-dense whole-tile reorder (primary kernel).

    x_ref: (ti*p, nW*p)  -> `ti` patch-rows of the (padded) image, full-width lanes.
    o_ref: (ti, nW*p*p)  -> `ti` rows of flattened patch tokens, full-width lanes.

    out[i, j*p*p + a*p + b] = x[i*p + a, j*p + b]  — the (a <-> j) axis swap of
    unfold(-2,p,p).unfold(-2,p,p).contiguous(), done as a single whole-tile
    reshape/transpose so Mosaic lowers it to XLU relayouts while loads/stores
    stay unmasked full-lane vld/vst.
    """
    v = x_ref[...]
    v = v.reshape(ti, p, nW, p)
    v = jnp.transpose(v, (0, 2, 1, 3))            # (ti, nW, p, p)
    o_ref[...] = v.reshape(ti, nW * p * p)


def _patches_slab_kernel(x_ref, o_ref, *, ti, p, nW):
    """Fallback kernel: pure ref slicing, no in-register reshapes (always lowers).

    x_ref: (ti, p, nW, p), o_ref: (ti, nW, p*p);  o[i, j, a*p + b] = x[i, a, j, b].
    Only p slab copies per grid step, each moving a full (ti, nW, p) slab.
    """
    for a in range(p):
        o_ref[:, :, a * p:(a + 1) * p] = x_ref[:, a, :, :]


# ---------------------------------------------------------------------------
# Tiling heuristic
# ---------------------------------------------------------------------------
def _pick_ti(nH, p, w_new, itemsize, target_block_bytes=2 << 20, min_steps=8):
    """Patch-rows per grid step.

    Constraints:
      * ti == nH  or  ti % 8 == 0, so the (ti, nW*p*p) / (ti*p, w_new) block
        shapes satisfy the (8, 128) sublane rule (last dims equal full dims).
      * ~target_block_bytes per block: big enough to amortize the ~0.35 us
        per-grid-step overhead, small enough that double-buffered in+out blocks
        fit v5e's 16 MiB scoped-VMEM default and v7x's 64 MiB VMEM.
      * keep >= min_steps grid steps when possible so the 'parallel' grid axis
        can be sharded across v7x's two TensorCores.
    """
    if nH <= min_steps:
        return nH
    row_bytes = p * w_new * itemsize
    ti = max(1, target_block_bytes // row_bytes)
    ti = min(ti, max(1, nH // min_steps))
    ti = (ti // 8) * 8
    if ti < 8:
        ti = 8
    return int(min(ti, nH))


# ---------------------------------------------------------------------------
# Wrapper
# ---------------------------------------------------------------------------
def basic_patches(x, patch_size):
    """Pallas TPU implementation of BasicPatches.forward for x of shape (1, H, W)."""
    p = patch_size
    _, H, W = x.shape
    h_new = p * (H // p) + p * int(H % p > 0)
    w_new = p * (W // p) + p * int(W % p > 0)
    nH, nW = h_new // p, w_new // p

    xs = x.reshape(H, W)                          # squeeze(0): contiguous, free
    if (h_new, w_new) != (H, W):
        # torchvision center_crop with target >= input == symmetric zero pad
        # (floor half on top/left, ceil half on bottom/right).
        # TODO(synk): fully fusing this pad into the kernel needs a manual-DMA
        # (pl.ANY) variant with per-edge static copy sizes; aligned inputs (the
        # common/fast case) skip the pad entirely and touch HBM only once.
        pad_top, pad_left = (h_new - H) // 2, (w_new - W) // 2
        xs = jnp.pad(xs, ((pad_top, h_new - H - pad_top),
                          (pad_left, w_new - W - pad_left)))

    ti = _pick_ti(nH, p, w_new, xs.dtype.itemsize)
    grid = (pl.cdiv(nH, ti),)
    cost = pl.CostEstimate(flops=0, transcendentals=0,
                           bytes_accessed=2 * h_new * w_new * xs.dtype.itemsize)
    cparams = pltpu.CompilerParams(
        dimension_semantics=("parallel",),        # distinct output rows per step
        vmem_limit_bytes=32 * 1024 * 1024,        # <= physical VMEM on v5e/v6e/v7x
    )

    def fast_path():
        kern = functools.partial(_patches_whole_tile_kernel, ti=ti, p=p, nW=nW)
        out = pl.pallas_call(
            kern,
            out_shape=jax.ShapeDtypeStruct((nH, nW * p * p), xs.dtype),
            grid=grid,
            in_specs=[pl.BlockSpec((ti * p, w_new), lambda t: (t, 0))],
            out_specs=pl.BlockSpec((ti, nW * p * p), lambda t: (t, 0)),
            compiler_params=cparams,
            cost_estimate=cost,
        )(xs)
        # make_4d_1d: flatten each p x p patch into a 1-D token (contiguous -> free).
        return out.reshape(nH * nW, p * p)

    def slab_path():
        kern = functools.partial(_patches_slab_kernel, ti=ti, p=p, nW=nW)
        x4 = xs.reshape(nH, p, nW, p)             # contiguous -> free
        out = pl.pallas_call(
            kern,
            out_shape=jax.ShapeDtypeStruct((nH, nW, p * p), xs.dtype),
            grid=grid,
            in_specs=[pl.BlockSpec((ti, p, nW, p), lambda t: (t, 0, 0, 0))],
            out_specs=pl.BlockSpec((ti, nW, p * p), lambda t: (t, 0, 0)),
            compiler_params=cparams,
            cost_estimate=cost,
        )(x4)
        return out.reshape(nH * nW, p * p)

    try:
        return fast_path()
    except Exception:
        # Mosaic rejected the whole-tile reshape/transpose for this shape/dtype;
        # use the slicing-only slab kernel (same blocking, guaranteed to lower).
        return slab_path()


# ---------------------------------------------------------------------------
# Pure-JAX reference reproducing the PyTorch semantics
# ---------------------------------------------------------------------------
def _reference(x, patch_size):
    p = patch_size
    _, H, W = x.shape
    h_new = p * (H // p) + p * int(H % p > 0)
    w_new = p * (W // p) + p * int(W % p > 0)
    pad_top, pad_bot = (h_new - H) // 2, (h_new - H + 1) // 2
    pad_left, pad_right = (w_new - W) // 2, (w_new - W + 1) // 2
    xp = jnp.pad(x, ((0, 0), (pad_top, pad_bot), (pad_left, pad_right)))[0]
    nH, nW = h_new // p, w_new // p
    # unfold(-2,p,p).unfold(-2,p,p) -> [i, j, a, b] with value xp[i*p+a, j*p+b]
    patches = xp.reshape(nH, p, nW, p).transpose(0, 2, 1, 3)
    return patches.reshape(nH * nW, p * p)


if __name__ == "__main__":
    key = jax.random.PRNGKey(0)
    cases = [
        (16, (1, 64, 128)),   # aligned: pad skipped entirely (fully fused path)
        (4, (1, 13, 10)),     # misaligned: exercises the center_crop zero-pad
    ]
    for patch_size, shape in cases:
        key, sub = jax.random.split(key)
        x = jax.random.normal(sub, shape, dtype=jnp.float32)

        out = jax.block_until_ready(basic_patches(x, patch_size))
        ref = _reference(x, patch_size)

        assert out.shape == ref.shape, (out.shape, ref.shape)
        assert bool(jnp.allclose(out, ref)), (
            f"Pallas output mismatch vs reference for p={patch_size}, shape={shape}")

    print("KERNEL_OK")
</pallas_src>

<mosaic_0001>
module attributes {stable_mosaic.version = 11 : i64} {
  func.func @_patches_whole_tile_kernel(%arg0: i32, %arg1: memref<64x128xf32, #tpu.memory_space<vmem>>, %arg2: memref<4x2048xf32, #tpu.memory_space<vmem>>) attributes {dimension_semantics = [#tpu.dimension_semantics<parallel>], iteration_bounds = array<i64: 1>, scalar_prefetch = 0 : i64, scratch_operands = 0 : i64, tpu.core_type = #tpu.core_type<tc>, window_params = [{transform_indices = @transform_0, window_bounds = array<i64: 64, 128>}, {transform_indices = @transform_1, window_bounds = array<i64: 4, 2048>}]} {
    %c0 = arith.constant 0 : index
    %c0_0 = arith.constant 0 : index
    %0 = vector.load %arg1[%c0, %c0_0] : memref<64x128xf32, #tpu.memory_space<vmem>>, vector<64x128xf32>
    %1 = vector.shape_cast %0 : vector<64x128xf32> to vector<4x16x8x16xf32>
    %2 = tpu.transpose %1, [0, 2, 1, 3] : vector<4x16x8x16xf32> -> vector<4x8x16x16xf32>
    %3 = vector.shape_cast %2 : vector<4x8x16x16xf32> to vector<4x2048xf32>
    %c0_1 = arith.constant 0 : index
    %c0_2 = arith.constant 0 : index
    %4 = vector.load %arg2[%c0_1, %c0_2] : memref<4x2048xf32, #tpu.memory_space<vmem>>, vector<4x2048xf32>
    tpu.vector_store %arg2[%c0_1, %c0_2], %3 {strides = array<i32>} : memref<4x2048xf32, #tpu.memory_space<vmem>>, vector<4x2048xf32>,
    return
  }
  func.func @transform_0(%arg0: i32) -> (i32, i32) {
    %c0_i32 = arith.constant 0 : i32
    %c0_i32_0 = arith.constant 0 : i32
    return %arg0, %c0_i32 : i32, i32
  }
  func.func @transform_1(%arg0: i32) -> (i32, i32) {
    %c0_i32 = arith.constant 0 : i32
    %c0_i32_0 = arith.constant 0 : i32
    return %arg0, %c0_i32 : i32, i32
  }
}

module attributes {stable_mosaic.version = 11 : i64} {
  func.func @_patches_slab_kernel(%arg0: i32, %arg1: memref<4x16x8x16xf32, #tpu.memory_space<vmem>>, %arg2: memref<4x8x256xf32, #tpu.memory_space<vmem>>) attributes {dimension_semantics = [#tpu.dimension_semantics<parallel>], iteration_bounds = array<i64: 1>, scalar_prefetch = 0 : i64, scratch_operands = 0 : i64, tpu.core_type = #tpu.core_type<tc>, window_params = [{transform_indices = @transform_0, window_bounds = array<i64: 4, 16, 8, 16>}, {transform_indices = @transform_1, window_bounds = array<i64: 4, 8, 256>}]} {
    %c0 = arith.constant 0 : index
    %c0_0 = arith.constant 0 : index
    %c0_1 = arith.constant 0 : index
    %c0_2 = arith.constant 0 : index
    %0 = vector.load %arg1[%c0, %c0_0, %c0_1, %c0_2] : memref<4x16x8x16xf32, #tpu.memory_space<vmem>>, vector<4x1x8x16xf32>
    %1 = vector.shape_cast %0 : vector<4x1x8x16xf32> to vector<4x8x16xf32>
    %c0_3 = arith.constant 0 : index
    %c0_4 = arith.constant 0 : index
    %c0_5 = arith.constant 0 : index
    %2 = vector.load %arg2[%c0_3, %c0_4, %c0_5] : memref<4x8x256xf32, #tpu.memory_space<vmem>>, vector<4x8x16xf32>
    tpu.vector_store %arg2[%c0_3, %c0_4, %c0_5], %1 {strides = array<i32>} : memref<4x8x256xf32, #tpu.memory_space<vmem>>, vector<4x8x16xf32>,
    %c0_6 = arith.constant 0 : index
    %c1 = arith.constant 1 : index
    %c0_7 = arith.constant 0 : index
    %c0_8 = arith.constant 0 : index
    %3 = vector.load %arg1[%c0_6, %c1, %c0_7, %c0_8] : memref<4x16x8x16xf32, #tpu.memory_space<vmem>>, vector<4x1x8x16xf32>
    %4 = vector.shape_cast %3 : vector<4x1x8x16xf32> to vector<4x8x16xf32>
    %c0_9 = arith.constant 0 : index
    %c0_10 = arith.constant 0 : index
    %c16 = arith.constant 16 : index
    %5 = vector.load %arg2[%c0_9, %c0_10, %c16] : memref<4x8x256xf32, #tpu.memory_space<vmem>>, vector<4x8x16xf32>
    tpu.vector_store %arg2[%c0_9, %c0_10, %c16], %4 {strides = array<i32>} : memref<4x8x256xf32, #tpu.memory_space<vmem>>, vector<4x8x16xf32>,
    %c0_11 = arith.constant 0 : index
    %c2 = arith.constant 2 : index
    %c0_12 = arith.constant 0 : index
    %c0_13 = arith.constant 0 : index
    %6 = vector.load %arg1[%c0_11, %c2, %c0_12, %c0_13] : memref<4x16x8x16xf32, #tpu.memory_space<vmem>>, vector<4x1x8x16xf32>
    %7 = vector.shape_cast %6 : vector<4x1x8x16xf32> to vector<4x8x16xf32>
    %c0_14 = arith.constant 0 : index
    %c0_15 = arith.constant 0 : index
    %c32 = arith.constant 32 : index
    %8 = vector.load %arg2[%c0_14, %c0_15, %c32] : memref<4x8x256xf32, #tpu.memory_space<vmem>>, vector<4x8x16xf32>
    tpu.vector_store %arg2[%c0_14, %c0_15, %c32], %7 {strides = array<i32>} : memref<4x8x256xf32, #tpu.memory_space<vmem>>, vector<4x8x16xf32>,
    %c0_16 = arith.constant 0 : index
    %c3 = arith.constant 3 : index
    %c0_17 = arith.constant 0 : index
    %c0_18 = arith.constant 0 : index
    %9 = vector.load %arg1[%c0_16, %c3, %c0_17, %c0_18] : memref<4x16x8x16xf32, #tpu.memory_space<vmem>>, vector<4x1x8x16xf32>
    %10 = vector.shape_cast %9 : vector<4x1x8x16xf32> to vector<4x8x16xf32>
    %c0_19 = arith.constant 0 : index
    %c0_20 = arith.constant 0 : index
    %c48 = arith.constant 48 : index
    %11 = vector.load %arg2[%c0_19, %c0_20, %c48] : memref<4x8x256xf32, #tpu.memory_space<vmem>>, vector<4x8x16xf32>
    tpu.vector_store %arg2[%c0_19, %c0_20, %c48], %10 {strides = array<i32>} : memref<4x8x256xf32, #tpu.memory_space<vmem>>, vector<4x8x16xf32>,
    %c0_21 = arith.constant 0 : index
    %c4 = arith.constant 4 : index
    %c0_22 = arith.constant 0 : index
    %c0_23 = arith.constant 0 : index
    %12 = vector.load %arg1[%c0_21, %c4, %c0_22, %c0_23] : memref<4x16x8x16xf32, #tpu.memory_space<vmem>>, vector<4x1x8x16xf32>
    %13 = vector.shape_cast %12 : vector<4x1x8x16xf32> to vector<4x8x16xf32>
    %c0_24 = arith.constant 0 : index
    %c0_25 = arith.constant 0 : index
    %c64 = arith.constant 64 : index
    %14 = vector.load %arg2[%c0_24, %c0_25, %c64] : memref<4x8x256xf32, #tpu.memory_space<vmem>>, vector<4x8x16xf32>
    tpu.vector_store %arg2[%c0_24, %c0_25, %c64], %13 {strides = array<i32>} : memref<4x8x256xf32, #tpu.memory_space<vmem>>, vector<4x8x16xf32>,
    %c0_26 = arith.constant 0 : index
    %c5 = arith.constant 5 : index
    %c0_27 = arith.constant 0 : index
    %c0_28 = arith.constant 0 : index
    %15 = vector.load %arg1[%c0_26, %c5, %c0_27, %c0_28] : memref<4x16x8x16xf32, #tpu.memory_space<vmem>>, vector<4x1x8x16xf32>
    %16 = vector.shape_cast %15 : vector<4x1x8x16xf32> to vector<4x8x16xf32>
    %c0_29 = arith.constant 0 : index
    %c0_30 = arith.constant 0 : index
    %c80 = arith.constant 80 : index
    %17 = vector.load %arg2[%c0_29, %c0_30, %c80] : memref<4x8x256xf32, #tpu.memory_space<vmem>>, vector<4x8x16xf32>
    tpu.vector_store %arg2[%c0_29, %c0_30, %c80], %16 {strides = array<i32>} : memref<4x8x256xf32, #tpu.memory_space<vmem>>, vector<4x8x16xf32>,
    %c0_31 = arith.constant 0 : index
    %c6 = arith.constant 6 : index
    %c0_32 = arith.constant 0 : index
    %c0_33 = arith.constant 0 : index
    %18 = vector.load %arg1[%c0_31, %c6, %c0_32, %c0_33] : memref<4x16x8x16xf32, #tpu.memory_space<vmem>>, vector<4x1x8x16xf32>
    %19 = vector.shape_cast %18 : vector<4x1x8x16xf32> to vector<4x8x16xf32>
    %c0_34 = arith.constant 0 : index
    %c0_35 = arith.constant 0 : index
    %c96 = arith.constant 96 : index
    %20 = vector.load %arg2[%c0_34, %c0_35, %c96] : memref<4x8x256xf32, #tpu.memory_space<vmem>>, vector<4x8x16xf32>
    tpu.vector_store %arg2[%c0_34, %c0_35, %c96], %19 {strides = array<i32>} : memref<4x8x256xf32, #tpu.memory_space<vmem>>, vector<4x8x16xf32>,
    %c0_36 = arith.constant 0 : index
    %c7 = arith.constant 7 : index
    %c0_37 = arith.constant 0 : index
    %c0_38 = arith.constant 0 : index
    %21 = vector.load %arg1[%c0_36, %c7, %c0_37, %c0_38] : memref<4x16x8x16xf32, #tpu.memory_space<vmem>>, vector<4x1x8x16xf32>
    %22 = vector.shape_cast %21 : vector<4x1x8x16xf32> to vector<4x8x16xf32>
    %c0_39 = arith.constant 0 : index
    %c0_40 = arith.constant 0 : index
    %c112 = arith.constant 112 : index
    %23 = vector.load %arg2[%c0_39, %c0_40, %c112] : memref<4x8x256xf32, #tpu.memory_space<vmem>>, vector<4x8x16xf32>
    tpu.vector_store %arg2[%c0_39, %c0_40, %c112], %22 {strides = array<i32>} : memref<4x8x256xf32, #tpu.memory_space<vmem>>, vector<4x8x16xf32>,
    %c0_41 = arith.constant 0 : index
    %c8 = arith.constant 8 : index
    %c0_42 = arith.constant 0 : index
    %c0_43 = arith.constant 0 : index
    %24 = vector.load %arg1[%c0_41, %c8, %c0_42, %c0_43] : memref<4x16x8x16xf32, #tpu.memory_space<vmem>>, vector<4x1x8x16xf32>
    %25 = vector.shape_cast %24 : vector<4x1x8x16xf32> to vector<4x8x16xf32>
    %c0_44 = arith.constant 0 : index
    %c0_45 = arith.constant 0 : index
    %c128 = arith.constant 128 : index
    %26 = vector.load %arg2[%c0_44, %c0_45, %c128] : memref<4x8x256xf32, #tpu.memory_space<vmem>>, vector<4x8x16xf32>
    tpu.vector_store %arg2[%c0_44, %c0_45, %c128], %25 {strides = array<i32>} : memref<4x8x256xf32, #tpu.memory_space<vmem>>, vector<4x8x16xf32>,
    %c0_46 = arith.constant 0 : index
    %c9 = arith.constant 9 : index
    %c0_47 = arith.constant 0 : index
    %c0_48 = arith.constant 0 : index
    %27 = vector.load %arg1[%c0_46, %c9, %c0_47, %c0_48] : memref<4x16x8x16xf32, #tpu.memory_space<vmem>>, vector<4x1x8x16xf32>
    %28 = vector.shape_cast %27 : vector<4x1x8x16xf32> to vector<4x8x16xf32>
    %c0_49 = arith.constant 0 : index
    %c0_50 = arith.constant 0 : index
    %c144 = arith.constant 144 : index
    %29 = vector.load %arg2[%c0_49, %c0_50, %c144] : memref<4x8x256xf32, #tpu.memory_space<vmem>>, vector<4x8x16xf32>
    tpu.vector_store %arg2[%c0_49, %c0_50, %c144], %28 {strides = array<i32>} : memref<4x8x256xf32, #tpu.memory_space<vmem>>, vector<4x8x16xf32>,
    %c0_51 = arith.constant 0 : index
    %c10 = arith.constant 10 : index
    %c0_52 = arith.constant 0 : index
    %c0_53 = arith.constant 0 : index
    %30 = vector.load %arg1[%c0_51, %c10, %c0_52, %c0_53] : memref<4x16x8x16xf32, #tpu.memory_space<vmem>>, vector<4x1x8x16xf32>
    %31 = vector.shape_cast %30 : vector<4x1x8x16xf32> to vector<4x8x16xf32>
    %c0_54 = arith.constant 0 : index
    %c0_55 = arith.constant 0 : index
    %c160 = arith.constant 160 : index
    %32 = vector.load %arg2[%c0_54, %c0_55, %c160] : memref<4x8x256xf32, #tpu.memory_space<vmem>>, vector<4x8x16xf32>
    tpu.vector_store %arg2[%c0_54, %c0_55, %c160], %31 {strides = array<i32>} : memref<4x8x256xf32, #tpu.memory_space<vmem>>, vector<4x8x16xf32>,
    %c0_56 = arith.constant 0 : index
    %c11 = arith.constant 11 : index
    %c0_57 = arith.constant 0 : index
    %c0_58 = arith.constant 0 : index
    %33 = vector.load %arg1[%c0_56, %c11, %c0_57, %c0_58] : memref<4x16x8x16xf32, #tpu.memory_space<vmem>>, vector<4x1x8x16xf32>
    %34 = vector.shape_cast %33 : vector<4x1x8x16xf32> to vector<4x8x16xf32>
    %c0_59 = arith.constant 0 : index
    %c0_60 = arith.constant 0 : index
    %c176 = arith.constant 176 : index
    %35 = vector.load %arg2[%c0_59, %c0_60, %c176] : memref<4x8x256xf32, #tpu.memory_space<vmem>>, vector<4x8x16xf32>
    tpu.vector_store %arg2[%c0_59, %c0_60, %c176], %34 {strides = array<i32>} : memref<4x8x256xf32, #tpu.memory_space<vmem>>, vector<4x8x16xf32>,
    %c0_61 = arith.constant 0 : index
    %c12 = arith.constant 12 : index
    %c0_62 = arith.constant 0 : index
    %c0_63 = arith.constant 0 : index
    %36 = vector.load %arg1[%c0_61, %c12, %c0_62, %c0_63] : memref<4x16x8x16xf32, #tpu.memory_space<vmem>>, vector<4x1x8x16xf32>
    %37 = vector.shape_cast %36 : vector<4x1x8x16xf32> to vector<4x8x16xf32>
    %c0_64 = arith.constant 0 : index
    %c0_65 = arith.constant 0 : index
    %c192 = arith.constant 192 : index
    %38 = vector.load %arg2[%c0_64, %c0_65, %c192] : memref<4x8x256xf32, #tpu.memory_space<vmem>>, vector<4x8x16xf32>
    tpu.vector_store %arg2[%c0_64, %c0_65, %c192], %37 {strides = array<i32>} : memref<4x8x256xf32, #tpu.memory_space<vmem>>, vector<4x8x16xf32>,
    %c0_66 = arith.constant 0 : index
    %c13 = arith.constant 13 : index
    %c0_67 = arith.constant 0 : index
    %c0_68 = arith.constant 0 : index
    %39 = vector.load %arg1[%c0_66, %c13, %c0_67, %c0_68] : memref<4x16x8x16xf32, #tpu.memory_space<vmem>>, vector<4x1x8x16xf32>
    %40 = vector.shape_cast %39 : vector<4x1x8x16xf32> to vector<4x8x16xf32>
    %c0_69 = arith.constant 0 : index
    %c0_70 = arith.constant 0 : index
    %c208 = arith.constant 208 : index
    %41 = vector.load %arg2[%c0_69, %c0_70, %c208] : memref<4x8x256xf32, #tpu.memory_space<vmem>>, vector<4x8x16xf32>
    tpu.vector_store %arg2[%c0_69, %c0_70, %c208], %40 {strides = array<i32>} : memref<4x8x256xf32, #tpu.memory_space<vmem>>, vector<4x8x16xf32>,
    %c0_71 = arith.constant 0 : index
    %c14 = arith.constant 14 : index
    %c0_72 = arith.constant 0 : index
    %c0_73 = arith.constant 0 : index
    %42 = vector.load %arg1[%c0_71, %c14, %c0_72, %c0_73] : memref<4x16x8x16xf32, #tpu.memory_space<vmem>>, vector<4x1x8x16xf32>
    %43 = vector.shape_cast %42 : vector<4x1x8x16xf32> to vector<4x8x16xf32>
    %c0_74 = arith.constant 0 : index
    %c0_75 = arith.constant 0 : index
    %c224 = arith.constant 224 : index
    %44 = vector.load %arg2[%c0_74, %c0_75, %c224] : memref<4x8x256xf32, #tpu.memory_space<vmem>>, vector<4x8x16xf32>
    tpu.vector_store %arg2[%c0_74, %c0_75, %c224], %43 {strides = array<i32>} : memref<4x8x256xf32, #tpu.memory_space<vmem>>, vector<4x8x16xf32>,
    %c0_76 = arith.constant 0 : index
    %c15 = arith.constant 15 : index
    %c0_77 = arith.constant 0 : index
    %c0_78 = arith.constant 0 : index
    %45 = vector.load %arg1[%c0_76, %c15, %c0_77, %c0_78] : memref<4x16x8x16xf32, #tpu.memory_space<vmem>>, vector<4x1x8x16xf32>
    %46 = vector.shape_cast %45 : vector<4x1x8x16xf32> to vector<4x8x16xf32>
    %c0_79 = arith.constant 0 : index
    %c0_80 = arith.constant 0 : index
    %c240 = arith.constant 240 : index
    %47 = vector.load %arg2[%c0_79, %c0_80, %c240] : memref<4x8x256xf32, #tpu.memory_space<vmem>>, vector<4x8x16xf32>
    tpu.vector_store %arg2[%c0_79, %c0_80, %c240], %46 {strides = array<i32>} : memref<4x8x256xf32, #tpu.memory_space<vmem>>, vector<4x8x16xf32>,
    return
  }
  func.func @transform_0(%arg0: i32) -> (i32, i32, i32, i32) {
    %c0_i32 = arith.constant 0 : i32
    %c0_i32_0 = arith.constant 0 : i32
    %c0_i32_1 = arith.constant 0 : i32
    %c0_i32_2 = arith.constant 0 : i32
    return %arg0, %c0_i32, %c0_i32_0, %c0_i32_1 : i32, i32, i32, i32
  }
  func.func @transform_1(%arg0: i32) -> (i32, i32, i32) {
    %c0_i32 = arith.constant 0 : i32
    %c0_i32_0 = arith.constant 0 : i32
    %c0_i32_1 = arith.constant 0 : i32
    return %arg0, %c0_i32, %c0_i32_0 : i32, i32, i32
  }
}

</mosaic_0001>

<llo_original>
// kernel: tpu_custom_call.1
$region0: #{tpu_custom_call.1}
  #allocation0 [shape = 'u32[]', space=smem, size = 0x4, offset = 0x4, fixed_abs, tag = 'smem constant byte address 0x4 - core index']
  #allocation1 [shape = 'u32[144,128]{1,0:T(1,128)}', space=vmem, size = 0x12000, scoped, tag = 'internal scratch']
  %s0 = inlined_call_operand.hbm [shape: f32[4,16,8,16], index: 0, kind: input, shape index: {}]
  %s1 = inlined_call_operand.hbm [shape: f32[4,8,256], index: 1, kind: output, shape index: {}]
  %s2 = sld [smem:[#allocation0]]
  $region18: #{tpu_custom_call.1} parent=0
    _
  %s4 = ssub.s32 1, %s2
  %s5 = scalar_select 0, %s4, %s2
  $region1: #{tpu_custom_call.1} parent=0
    #allocation2 [shape = 'u8[262144]{0}', space=vmem, size = 0x40000, scoped, tag = 'input window, operand 0, single buffered']
    #allocation3 [shape = 's32[1]{0}', space=sflag, size = 0x4, scoped, tag = 'scoped memory for tpu_custom_call.1']
    #allocation4 [shape = 's32[1]{0}', space=sflag, size = 0x4, scoped, tag = 'scoped memory for tpu_custom_call.1']
    #allocation5 [shape = 'u8[32768]{0}', space=vmem, size = 0x8000, scoped, tag = 'output window, operand 0, single buffered']
    %6 = vsyncpa [#allocation3], 0
    %7 = vsyncpa [#allocation4], 0
    // Predicated region
    $region2: #{tpu_custom_call.1} parent=1 // pred_check
      _
    $region3: #{tpu_custom_call.1} parent=1 // pred_check_branch
      %9 = sbr.rel (0) target = $region5
    $region4: #{tpu_custom_call.1} parent=1 // pred_region
      %s11 = ssub.s32 8192, 8192
      %12 = vsyncadd [#allocation3], %s11
      %s13 = sshll.u32 [#allocation2], 4
      %s14 = int_to_ptr.vmem [resolvable:$true] %s13
      %19 = dma.hbm_to_vmem [thread:$0]  %s0, 8192, %s14, [#allocation3], 128, 128, 8
    $region5: #{tpu_custom_call.1} parent=1 // pred_fallthru
      _
    // Predicated region
    $region6: #{tpu_custom_call.1} parent=1 // pred_check
      _
    $region7: #{tpu_custom_call.1} parent=1 // pred_check_branch
      %21 = sbr.rel (0) target = $region9
    $region8: #{tpu_custom_call.1} parent=1 // pred_region
      %22 = dma.done [#allocation3], 8192
    $region9: #{tpu_custom_call.1} parent=1 // pred_fallthru
      _
    %v23 = vld [vmem:[#allocation2] sm:$0xff]
    %v24 = vld [vmem:[#allocation2 + $0x80] sm:$0xff]
    %v25 = vld [vmem:[#allocation2 + $0x100] sm:$0xff]
    %v26 = vld [vmem:[#allocation2 + $0x180] sm:$0xff]
    %vm27 = vcmask 130048
    %28 = vst.msk [vmem:[#allocation5] sm:$0xff] %vm27, %v23
    %29 = vst.msk [vmem:[#allocation5 + $0x10] sm:$0xff] %vm27, %v24
    %30 = vst.msk [vmem:[#allocation5 + $0x20] sm:$0xff] %vm27, %v25
    %31 = vst.msk [vmem:[#allocation5 + $0x30] sm:$0xff] %vm27, %v26
    %s32 = scalar_lea.vmem [#allocation2], 8
    %v33 = vld [vmem:[%s32] sm:$0xff]
    %v34 = vld [vmem:[%s32 + $0x80] sm:$0xff]
    %v35 = vld [vmem:[%s32 + $0x100] sm:$0xff]
    %v36 = vld [vmem:[%s32 + $0x180] sm:$0xff]
    %41 = vrot.lane.b32.xlu0 %v33, 16
    %v42 = vpop.permute.xlu0 %41
    %43 = vrot.lane.b32.xlu0 %v34, 16
    %v44 = vpop.permute.xlu0 %43
    %45 = vrot.lane.b32.xlu0 %v35, 16
    %v46 = vpop.permute.xlu0 %45
    %47 = vrot.lane.b32.xlu0 %v36, 16
    %v48 = vpop.permute.xlu0 %47
    %vm53 = vcmask 261248
    %54 = vst.msk [vmem:[#allocation5] sm:$0xff] %vm53, %v42
    %55 = vst.msk [vmem:[#allocation5 + $0x10] sm:$0xff] %vm53, %v44
    %56 = vst.msk [vmem:[#allocation5 + $0x20] sm:$0xff] %vm53, %v46
    %57 = vst.msk [vmem:[#allocation5 + $0x30] sm:$0xff] %vm53, %v48
    %s58 = scalar_lea.vmem [#allocation2], 16
    %v59 = vld [vmem:[%s58] sm:$0xff]
    %v60 = vld [vmem:[%s58 + $0x80] sm:$0xff]
    %v61 = vld [vmem:[%s58 + $0x100] sm:$0xff]
    %v62 = vld [vmem:[%s58 + $0x180] sm:$0xff]
    %67 = vrot.lane.b32.xlu0 %v59, 32
    %v68 = vpop.permute.xlu0 %67
    %69 = vrot.lane.b32.xlu0 %v60, 32
    %v70 = vpop.permute.xlu0 %69
    %71 = vrot.lane.b32.xlu0 %v61, 32
    %v72 = vpop.permute.xlu0 %71
    %73 = vrot.lane.b32.xlu0 %v62, 32
    %v74 = vpop.permute.xlu0 %73
    %vm79 = vcmask 392448
    %80 = vst.msk [vmem:[#allocation5] sm:$0xff] %vm79, %v68
    %81 = vst.msk [vmem:[#allocation5 + $0x10] sm:$0xff] %vm79, %v70
    %82 = vst.msk [vmem:[#allocation5 + $0x20] sm:$0xff] %vm79, %v72
    %83 = vst.msk [vmem:[#allocation5 + $0x30] sm:$0xff] %vm79, %v74
    %s84 = scalar_lea.vmem [#allocation2], 24
    %v85 = vld [vmem:[%s84] sm:$0xff]
    %v86 = vld [vmem:[%s84 + $0x80] sm:$0xff]
    %v87 = vld [vmem:[%s84 + $0x100] sm:$0xff]
    %v88 = vld [vmem:[%s84 + $0x180] sm:$0xff]
    %93 = vrot.lane.b32.xlu0 %v85, 48
    %v94 = vpop.permute.xlu0 %93
    %95 = vrot.lane.b32.xlu0 %v86, 48
    %v96 = vpop.permute.xlu0 %95
    %97 = vrot.lane.b32.xlu0 %v87, 48
    %v98 = vpop.permute.xlu0 %97
    %99 = vrot.lane.b32.xlu0 %v88, 48
    %v100 = vpop.permute.xlu0 %99
    %vm105 = vcmask 523648
    %106 = vst.msk [vmem:[#allocation5] sm:$0xff] %vm105, %v94
    %107 = vst.msk [vmem:[#allocation5 + $0x10] sm:$0xff] %vm105, %v96
    %108 = vst.msk [vmem:[#allocation5 + $0x20] sm:$0xff] %vm105, %v98
    %109 = vst.msk [vmem:[#allocation5 + $0x30] sm:$0xff] %vm105, %v100
    %s110 = scalar_lea.vmem [#allocation2], 32
    %v111 = vld [vmem:[%s110] sm:$0xff]
    %v112 = vld [vmem:[%s110 + $0x80] sm:$0xff]
    %v113 = vld [vmem:[%s110 + $0x100] sm:$0xff]
    %v114 = vld [vmem:[%s110 + $0x180] sm:$0xff]
    %119 = vrot.lane.b32.xlu0 %v111, 64
    %v120 = vpop.permute.xlu0 %119
    %121 = vrot.lane.b32.xlu0 %v112, 64
    %v122 = vpop.permute.xlu0 %121
    %123 = vrot.lane.b32.xlu0 %v113, 64
    %v124 = vpop.permute.xlu0 %123
    %125 = vrot.lane.b32.xlu0 %v114, 64
    %v126 = vpop.permute.xlu0 %125
    %vm131 = vcmask 654848
    %132 = vst.msk [vmem:[#allocation5] sm:$0xff] %vm131, %v120
    %133 = vst.msk [vmem:[#allocation5 + $0x10] sm:$0xff] %vm131, %v122
    %134 = vst.msk [vmem:[#allocation5 + $0x20] sm:$0xff] %vm131, %v124
    %135 = vst.msk [vmem:[#allocation5 + $0x30] sm:$0xff] %vm131, %v126
    %s136 = scalar_lea.vmem [#allocation2], 40
    %v137 = vld [vmem:[%s136] sm:$0xff]
    %v138 = vld [vmem:[%s136 + $0x80] sm:$0xff]
    %v139 = vld [vmem:[%s136 + $0x100] sm:$0xff]
    %v140 = vld [vmem:[%s136 + $0x180] sm:$0xff]
    %145 = vrot.lane.b32.xlu0 %v137, 80
    %v146 = vpop.permute.xlu0 %145
    %147 = vrot.lane.b32.xlu0 %v138, 80
    %v148 = vpop.permute.xlu0 %147
    %149 = vrot.lane.b32.xlu0 %v139, 80
    %v150 = vpop.permute.xlu0 %149
    %151 = vrot.lane.b32.xlu0 %v140, 80
    %v152 = vpop.permute.xlu0 %151
    %vm157 = vcmask 786048
    %158 = vst.msk [vmem:[#allocation5] sm:$0xff] %vm157, %v146
    %159 = vst.msk [vmem:[#allocation5 + $0x10] sm:$0xff] %vm157, %v148
    %160 = vst.msk [vmem:[#allocation5 + $0x20] sm:$0xff] %vm157, %v150
    %161 = vst.msk [vmem:[#allocation5 + $0x30] sm:$0xff] %vm157, %v152
    %s162 = scalar_lea.vmem [#allocation2], 48
    %v163 = vld [vmem:[%s162] sm:$0xff]
    %v164 = vld [vmem:[%s162 + $0x80] sm:$0xff]
    %v165 = vld [vmem:[%s162 + $0x100] sm:$0xff]
    %v166 = vld [vmem:[%s162 + $0x180] sm:$0xff]
    %171 = vrot.lane.b32.xlu0 %v163, 96
    %v172 = vpop.permute.xlu0 %171
    %173 = vrot.lane.b32.xlu0 %v164, 96
    %v174 = vpop.permute.xlu0 %173
    %175 = vrot.lane.b32.xlu0 %v165, 96
    %v176 = vpop.permute.xlu0 %175
    %177 = vrot.lane.b32.xlu0 %v166, 96
    %v178 = vpop.permute.xlu0 %177
    %vm183 = vcmask 917248
    %184 = vst.msk [vmem:[#allocation5] sm:$0xff] %vm183, %v172
    %185 = vst.msk [vmem:[#allocation5 + $0x10] sm:$0xff] %vm183, %v174
    %186 = vst.msk [vmem:[#allocation5 + $0x20] sm:$0xff] %vm183, %v176
    %187 = vst.msk [vmem:[#allocation5 + $0x30] sm:$0xff] %vm183, %v178
    %s188 = scalar_lea.vmem [#allocation2], 56
    %v189 = vld [vmem:[%s188] sm:$0xff]
    %v190 = vld [vmem:[%s188 + $0x80] sm:$0xff]
    %v191 = vld [vmem:[%s188 + $0x100] sm:$0xff]
    %v192 = vld [vmem:[%s188 + $0x180] sm:$0xff]
    %197 = vrot.lane.b32.xlu0 %v189, 112
    %v198 = vpop.permute.xlu0 %197
    %199 = vrot.lane.b32.xlu0 %v190, 112
    %v200 = vpop.permute.xlu0 %199
    %201 = vrot.lane.b32.xlu0 %v191, 112
    %v202 = vpop.permute.xlu0 %201
    %203 = vrot.lane.b32.xlu0 %v192, 112
    %v204 = vpop.permute.xlu0 %203
    %vm209 = vcmask 1048448
    %210 = vst.msk [vmem:[#allocation5] sm:$0xff] %vm209, %v198
    %211 = vst.msk [vmem:[#allocation5 + $0x10] sm:$0xff] %vm209, %v200
    %212 = vst.msk [vmem:[#allocation5 + $0x20] sm:$0xff] %vm209, %v202
    %213 = vst.msk [vmem:[#allocation5 + $0x30] sm:$0xff] %vm209, %v204
    %s214 = scalar_lea.vmem [#allocation2], 64
    %v215 = vld [vmem:[%s214] sm:$0xff]
    %v216 = vld [vmem:[%s214 + $0x80] sm:$0xff]
    %v217 = vld [vmem:[%s214 + $0x100] sm:$0xff]
    %v218 = vld [vmem:[%s214 + $0x180] sm:$0xff]
    %219 = vst.msk [vmem:[#allocation5 + $0x8] sm:$0xff] %vm27, %v215
    %220 = vst.msk [vmem:[#allocation5 + $0x18] sm:$0xff] %vm27, %v216
    %221 = vst.msk [vmem:[#allocation5 + $0x28] sm:$0xff] %vm27, %v217
    %222 = vst.msk [vmem:[#allocation5 + $0x38] sm:$0xff] %vm27, %v218
    %s223 = scalar_lea.vmem [#allocation2], 72
    %v224 = vld [vmem:[%s223] sm:$0xff]
    %v225 = vld [vmem:[%s223 + $0x80] sm:$0xff]
    %v226 = vld [vmem:[%s223 + $0x100] sm:$0xff]
    %v227 = vld [vmem:[%s223 + $0x180] sm:$0xff]
    %232 = vrot.lane.b32.xlu0 %v224, 16
    %v233 = vpop.permute.xlu0 %232
    %234 = vrot.lane.b32.xlu0 %v225, 16
    %v235 = vpop.permute.xlu0 %234
    %236 = vrot.lane.b32.xlu0 %v226, 16
    %v237 = vpop.permute.xlu0 %236
    %238 = vrot.lane.b32.xlu0 %v227, 16
    %v239 = vpop.permute.xlu0 %238
    %244 = vst.msk [vmem:[#allocation5 + $0x8] sm:$0xff] %vm53, %v233
    %245 = vst.msk [vmem:[#allocation5 + $0x18] sm:$0xff] %vm53, %v235
    %246 = vst.msk [vmem:[#allocation5 + $0x28] sm:$0xff] %vm53, %v237
    %247 = vst.msk [vmem:[#allocation5 + $0x38] sm:$0xff] %vm53, %v239
    %s248 = scalar_lea.vmem [#allocation2], 80
    %v249 = vld [vmem:[%s248] sm:$0xff]
    %v250 = vld [vmem:[%s248 + $0x80] sm:$0xff]
    %v251 = vld [vmem:[%s248 + $0x100] sm:$0xff]
    %v252 = vld [vmem:[%s248 + $0x180] sm:$0xff]
    %257 = vrot.lane.b32.xlu0 %v249, 32
    %v258 = vpop.permute.xlu0 %257
    %259 = vrot.lane.b32.xlu0 %v250, 32
    %v260 = vpop.permute.xlu0 %259
    %261 = vrot.lane.b32.xlu0 %v251, 32
    %v262 = vpop.permute.xlu0 %261
    %263 = vrot.lane.b32.xlu0 %v252, 32
    %v264 = vpop.permute.xlu0 %263
    %269 = vst.msk [vmem:[#allocation5 + $0x8] sm:$0xff] %vm79, %v258
    %270 = vst.msk [vmem:[#allocation5 + $0x18] sm:$0xff] %vm79, %v260
    %271 = vst.msk [vmem:[#allocation5 + $0x28] sm:$0xff] %vm79, %v262
    %272 = vst.msk [vmem:[#allocation5 + $0x38] sm:$0xff] %vm79, %v264
    %s273 = scalar_lea.vmem [#allocation2], 88
    %v274 = vld [vmem:[%s273] sm:$0xff]
    %v275 = vld [vmem:[%s273 + $0x80] sm:$0xff]
    %v276 = vld [vmem:[%s273 + $0x100] sm:$0xff]
    %v277 = vld [vmem:[%s273 + $0x180] sm:$0xff]
    %282 = vrot.lane.b32.xlu0 %v274, 48
    %v283 = vpop.permute.xlu0 %282
    %284 = vrot.lane.b32.xlu0 %v275, 48
    %v285 = vpop.permute.xlu0 %284
    %286 = vrot.lane.b32.xlu0 %v276, 48
    %v287 = vpop.permute.xlu0 %286
    %288 = vrot.lane.b32.xlu0 %v277, 48
    %v289 = vpop.permute.xlu0 %288
    %294 = vst.msk [vmem:[#allocation5 + $0x8] sm:$0xff] %vm105, %v283
    %295 = vst.msk [vmem:[#allocation5 + $0x18] sm:$0xff] %vm105, %v285
    %296 = vst.msk [vmem:[#allocation5 + $0x28] sm:$0xff] %vm105, %v287
    %297 = vst.msk [vmem:[#allocation5 + $0x38] sm:$0xff] %vm105, %v289
    %s298 = scalar_lea.vmem [#allocation2], 96
    %v299 = vld [vmem:[%s298] sm:$0xff]
    %v300 = vld [vmem:[%s298 + $0x80] sm:$0xff]
    %v301 = vld [vmem:[%s298 + $0x100] sm:$0xff]
    %v302 = vld [vmem:[%s298 + $0x180] sm:$0xff]
    %307 = vrot.lane.b32.xlu0 %v299, 64
    %v308 = vpop.permute.xlu0 %307
    %309 = vrot.lane.b32.xlu0 %v300, 64
    %v310 = vpop.permute.xlu0 %309
    %311 = vrot.lane.b32.xlu0 %v301, 64
    %v312 = vpop.permute.xlu0 %311
    %313 = vrot.lane.b32.xlu0 %v302, 64
    %v314 = vpop.permute.xlu0 %313
    %319 = vst.msk [vmem:[#allocation5 + $0x8] sm:$0xff] %vm131, %v308
    %320 = vst.msk [vmem:[#allocation5 + $0x18] sm:$0xff] %vm131, %v310
    %321 = vst.msk [vmem:[#allocation5 + $0x28] sm:$0xff] %vm131, %v312
    %322 = vst.msk [vmem:[#allocation5 + $0x38] sm:$0xff] %vm131, %v314
    %s323 = scalar_lea.vmem [#allocation2], 104
    %v324 = vld [vmem:[%s323] sm:$0xff]
    %v325 = vld [vmem:[%s323 + $0x80] sm:$0xff]
    %v326 = vld [vmem:[%s323 + $0x100] sm:$0xff]
    %v327 = vld [vmem:[%s323 + $0x180] sm:$0xff]
    %332 = vrot.lane.b32.xlu0 %v324, 80
    %v333 = vpop.permute.xlu0 %332
    %334 = vrot.lane.b32.xlu0 %v325, 80
    %v335 = vpop.permute.xlu0 %334
    %336 = vrot.lane.b32.xlu0 %v326, 80
    %v337 = vpop.permute.xlu0 %336
    %338 = vrot.lane.b32.xlu0 %v327, 80
    %v339 = vpop.permute.xlu0 %338
    %344 = vst.msk [vmem:[#allocation5 + $0x8] sm:$0xff] %vm157, %v333
    %345 = vst.msk [vmem:[#allocation5 + $0x18] sm:$0xff] %vm157, %v335
    %346 = vst.msk [vmem:[#allocation5 + $0x28] sm:$0xff] %vm157, %v337
    %347 = vst.msk [vmem:[#allocation5 + $0x38] sm:$0xff] %vm157, %v339
    %s348 = scalar_lea.vmem [#allocation2], 112
    %v349 = vld [vmem:[%s348] sm:$0xff]
    %v350 = vld [vmem:[%s348 + $0x80] sm:$0xff]
    %v351 = vld [vmem:[%s348 + $0x100] sm:$0xff]
    %v352 = vld [vmem:[%s348 + $0x180] sm:$0xff]
    %357 = vrot.lane.b32.xlu0 %v349, 96
    %v358 = vpop.permute.xlu0 %357
    %359 = vrot.lane.b32.xlu0 %v350, 96
    %v360 = vpop.permute.xlu0 %359
    %361 = vrot.lane.b32.xlu0 %v351, 96
    %v362 = vpop.permute.xlu0 %361
    %363 = vrot.lane.b32.xlu0 %v352, 96
    %v364 = vpop.permute.xlu0 %363
    %369 = vst.msk [vmem:[#allocation5 + $0x8] sm:$0xff] %vm183, %v358
    %370 = vst.msk [vmem:[#allocation5 + $0x18] sm:$0xff] %vm183, %v360
    %371 = vst.msk [vmem:[#allocation5 + $0x28] sm:$0xff] %vm183, %v362
    %372 = vst.msk [vmem:[#allocation5 + $0x38] sm:$0xff] %vm183, %v364
    %s373 = scalar_lea.vmem [#allocation2], 120
    %v374 = vld [vmem:[%s373] sm:$0xff]
    %v375 = vld [vmem:[%s373 + $0x80] sm:$0xff]
    %v376 = vld [vmem:[%s373 + $0x100] sm:$0xff]
    %v377 = vld [vmem:[%s373 + $0x180] sm:$0xff]
    %382 = vrot.lane.b32.xlu0 %v374, 112
    %v383 = vpop.permute.xlu0 %382
    %384 = vrot.lane.b32.xlu0 %v375, 112
    %v385 = vpop.permute.xlu0 %384
    %386 = vrot.lane.b32.xlu0 %v376, 112
    %v387 = vpop.permute.xlu0 %386
    %388 = vrot.lane.b32.xlu0 %v377, 112
    %v389 = vpop.permute.xlu0 %388
    %394 = vst.msk [vmem:[#allocation5 + $0x8] sm:$0xff] %vm209, %v383
    %395 = vst.msk [vmem:[#allocation5 + $0x18] sm:$0xff] %vm209, %v385
    %396 = vst.msk [vmem:[#allocation5 + $0x28] sm:$0xff] %vm209, %v387
    %397 = vst.msk [vmem:[#allocation5 + $0x38] sm:$0xff] %vm209, %v389
    // Predicated region
    $region10: #{tpu_custom_call.1} parent=1 // pred_check
      _
    $region11: #{tpu_custom_call.1} parent=1 // pred_check_branch
      %399 = sbr.rel (0) target = $region13
    $region12: #{tpu_custom_call.1} parent=1 // pred_region
      %s401 = ssub.s32 1024, 1024
      %402 = vsyncadd [#allocation4], %s401
      %s403 = sshll.u32 [#allocation5], 4
      %s404 = int_to_ptr.vmem [resolvable:$true] %s403
      %409 = dma.vmem_to_hbm [thread:$0]  %s404, 1024, %s1, [#allocation4], 256, 256, 16
    $region13: #{tpu_custom_call.1} parent=1 // pred_fallthru
      _
    // Predicated region
    $region14: #{tpu_custom_call.1} parent=1 // pred_check
      _
    $region15: #{tpu_custom_call.1} parent=1 // pred_check_branch
      %411 = sbr.rel (0) target = $region17
    $region16: #{tpu_custom_call.1} parent=1 // pred_region
      %412 = dma.done [#allocation4], 1024
    $region17: #{tpu_custom_call.1} parent=1 // pred_fallthru
      _
    %413 = vsyncpa [#allocation3], 1
    %414 = vsyncpa [#allocation4], 1

</llo_original>
